<compile_context>
chip_gen: v5e
topology: v5e:2x2
jax: 0.10.0
libtpu: 0.0.40
codegen_flags: <defaults>
</compile_context>

<pallas_src>
import functools
import math

import jax
import jax.numpy as jnp
from jax.experimental import pallas as pl
from jax.experimental.pallas import tpu as pltpu


def _round_up(x, m):
    return ((x + m - 1) // m) * m


# ---------------------------------------------------------------------------
# Kernel
# ---------------------------------------------------------------------------
def label_smoothing_kernel(tgt_ref, x_ref, out_ref, *,
                           padding_idx, confidence, smooth_val,
                           log_conf, log_smooth):
    """One grid step processes rows [row0, row0 + bm) of the padded batch.

    tgt_ref : (N_pad, 1) int32, resident in VMEM for the whole grid.
    x_ref   : (bm, V) log-probabilities (f32 or bf16), streamed per step.
    out_ref : (8, V) f32 per-chunk partial-sum accumulator, resident across
              the "arbitrary" row axis of this chunk.
    """
    i = pl.program_id(1)

    @pl.when(i == 0)
    def _init():
        out_ref[...] = jnp.zeros_like(out_ref)

    x = x_ref[...].astype(jnp.float32)                      # (bm, V)
    bm, V = x.shape

    # Slice this block's targets out of the resident target buffer.
    idx = pl.program_id(0) * pl.num_programs(1) + i
    row0 = pl.multiple_of(idx * bm, bm)
    tgt = tgt_ref[pl.ds(row0, bm), :]                       # (bm, 1) int32

    col = jax.lax.broadcasted_iota(jnp.int32, (bm, V), 1)
    is_tgt = col == tgt

    # true_dist only takes the two positive values {confidence, smooth_val};
    # their logs are compile-time constants -> no per-element EUP log.
    td = jnp.where(is_tgt, jnp.float32(confidence), jnp.float32(smooth_val))
    log_td = jnp.where(is_tgt, jnp.float32(log_conf), jnp.float32(log_smooth))

    # Zero contribution on the padding column and on padding rows
    # (batch-padding rows carry target == padding_idx, so they are covered).
    zero = (col == padding_idx) | (tgt == padding_idx)
    contrib = jnp.where(zero, jnp.float32(0.0), td * (log_td - x))

    # Fold rows into the resident (8, V) accumulator. The reshape only splits
    # the sublane dim by its tile size (8), so it is layout-trivial, and the
    # leading-axis sum lowers to plain vector adds (no cross-lane XLU work,
    # no serialized scalar accumulation per step).
    out_ref[...] += jnp.sum(contrib.reshape(bm // 8, 8, V), axis=0)


# ---------------------------------------------------------------------------
# Wrapper
# ---------------------------------------------------------------------------
def label_smoothing_pallas(x, target, *, size, padding_idx=0, smoothing=0.0,
                           block_rows=None, num_chunks=2):
    """x: (N, size) log-probs (f32 or bf16), target: (N,) ints -> scalar f32."""
    N, V = x.shape
    assert V == size, "class dim must equal `size`"

    confidence = 1.0 - smoothing
    smooth_val = smoothing / (size - 2) if smoothing > 0.0 else 0.0
    # Compile-time logs; guarded so that 0 * (log_const - x) == 0 exactly.
    log_conf = math.log(confidence) if confidence > 0.0 else 0.0
    log_smooth = math.log(smooth_val) if smooth_val > 0.0 else 0.0

    # Row tile: target ~4 MiB per (double-buffered) x block, never more rows
    # than one chunk actually needs, always a multiple of 8.
    if block_rows is None:
        bytes_per_row = V * jnp.dtype(x.dtype).itemsize
        vmem_rows = max(8, ((4 * 1024 * 1024) // bytes_per_row) // 8 * 8)
        need_rows = _round_up(pl.cdiv(N, num_chunks), 8)
        block_rows = max(8, min(vmem_rows, need_rows, 2048))
    assert block_rows % 8 == 0

    # Pad rows so N divides num_chunks * block_rows; padded rows carry
    # target == padding_idx and therefore contribute exactly 0 to the loss.
    n_pad = _round_up(N, num_chunks * block_rows)
    if n_pad != N:
        x = jnp.pad(x, ((0, n_pad - N), (0, 0)))
        target = jnp.pad(target, (0, n_pad - N), constant_values=padding_idx)
    steps = n_pad // (num_chunks * block_rows)
    target2d = target.reshape(n_pad, 1).astype(jnp.int32)
    # TODO(synk): for very large vocabularies (block_rows*V*4B over the VMEM
    # budget) also tile the class axis with a trailing "arbitrary" grid dim.

    kernel = functools.partial(
        label_smoothing_kernel,
        padding_idx=padding_idx, confidence=confidence, smooth_val=smooth_val,
        log_conf=log_conf, log_smooth=log_smooth)

    x_bytes = n_pad * V * jnp.dtype(x.dtype).itemsize
    partials = pl.pallas_call(
        kernel,
        out_shape=jax.ShapeDtypeStruct((num_chunks * 8, V), jnp.float32),
        grid=(num_chunks, steps),
        in_specs=[
            # Targets: one resident VMEM buffer for the whole grid (one DMA).
            pl.BlockSpec((n_pad, 1), lambda c, i: (0, 0)),
            # Log-probs: large lane-dense row tiles streamed per step.
            pl.BlockSpec((block_rows, V), lambda c, i: (c * steps + i, 0)),
        ],
        # Per-chunk (8, V) partial sums, resident across the row axis.
        out_specs=pl.BlockSpec((8, V), lambda c, i: (c, 0)),
        compiler_params=pltpu.CompilerParams(
            dimension_semantics=("parallel", "arbitrary"),
            vmem_limit_bytes=40 * 1024 * 1024,
        ),
        cost_estimate=pl.CostEstimate(
            flops=10 * n_pad * V,
            transcendentals=0,
            bytes_accessed=x_bytes + 4 * n_pad + 4 * num_chunks * 8 * V),
    )(target2d, x)
    return jnp.sum(partials)


# ---------------------------------------------------------------------------
# Pure-JAX reference (mirrors the PyTorch module exactly)
# ---------------------------------------------------------------------------
def label_smoothing_ref(x, target, *, size, padding_idx=0, smoothing=0.0):
    N = x.shape[0]
    confidence = 1.0 - smoothing
    true_dist = jnp.full((N, size), smoothing / (size - 2), jnp.float32)
    true_dist = true_dist.at[jnp.arange(N), target].set(confidence)
    true_dist = true_dist.at[:, padding_idx].set(0.0)
    true_dist = jnp.where((target == padding_idx)[:, None], 0.0, true_dist)
    safe = jnp.where(true_dist > 0, true_dist, 1.0)
    contrib = jnp.where(true_dist > 0, true_dist * (jnp.log(safe) - x), 0.0)
    return jnp.sum(contrib)


# ---------------------------------------------------------------------------
# Main
# ---------------------------------------------------------------------------
if __name__ == "__main__":
    N, size = 60, 128          # (batch*seq rows, vocab size) -- small demo
    padding_idx = 0
    smoothing = 0.1

    key = jax.random.PRNGKey(0)
    kx, kt = jax.random.split(key)

    # x is expected to be log-probabilities (KLDivLoss convention).
    logits = jax.random.normal(kx, (N, size), jnp.float32)
    x = jax.nn.log_softmax(logits, axis=-1)

    target = jax.random.randint(kt, (N,), 1, size, dtype=jnp.int32)
    # include some padding rows to exercise the index_fill_ path
    target = target.at[3].set(padding_idx).at[17].set(padding_idx)

    loss = label_smoothing_pallas(
        x, target, size=size, padding_idx=padding_idx, smoothing=smoothing)
    loss = jax.block_until_ready(loss)

    ref = label_smoothing_ref(
        x, target, size=size, padding_idx=padding_idx, smoothing=smoothing)
    assert jnp.allclose(loss, ref, atol=1e-3, rtol=1e-4), (loss, ref)

    print("KERNEL_OK")
</pallas_src>

<mosaic_0001>
module attributes {stable_mosaic.version = 11 : i64} {
  func.func @label_smoothing_kernel(%arg0: i32, %arg1: i32, %arg2: memref<64x1xi32, #tpu.memory_space<vmem>>, %arg3: memref<32x128xf32, #tpu.memory_space<vmem>>, %arg4: memref<8x128xf32, #tpu.memory_space<vmem>>) attributes {dimension_semantics = [#tpu.dimension_semantics<parallel>, #tpu.dimension_semantics<arbitrary>], iteration_bounds = array<i64: 2, 1>, scalar_prefetch = 0 : i64, scratch_operands = 0 : i64, tpu.core_type = #tpu.core_type<tc>, window_params = [{pipeline_mode = #tpu.pipeline_mode<synchronous>, transform_indices = @transform_0, window_bounds = array<i64: 64, 1>}, {transform_indices = @transform_1, window_bounds = array<i64: 32, 128>}, {transform_indices = @transform_2, window_bounds = array<i64: 8, 128>}]} {
    %c0_i32 = arith.constant 0 : i32
    %0 = arith.cmpi eq, %arg1, %c0_i32 : i32
    %1 = arith.extui %0 : i1 to i32
    %c0_i32_0 = arith.constant 0 : i32
    %2 = arith.cmpi ne, %1, %c0_i32_0 : i32
    scf.if %2 {
      %cst_14 = arith.constant 0.000000e+00 : f32
      %34 = vector.broadcast %cst_14 : f32 to vector<8x128xf32>
      %c0_15 = arith.constant 0 : index
      %c0_16 = arith.constant 0 : index
      %35 = vector.load %arg4[%c0_15, %c0_16] : memref<8x128xf32, #tpu.memory_space<vmem>>, vector<8x128xf32>
      tpu.vector_store %arg4[%c0_15, %c0_16], %34 {strides = array<i32>} : memref<8x128xf32, #tpu.memory_space<vmem>>, vector<8x128xf32>,
    } else {
    }
    %c0 = arith.constant 0 : index
    %c0_1 = arith.constant 0 : index
    %3 = vector.load %arg3[%c0, %c0_1] : memref<32x128xf32, #tpu.memory_space<vmem>>, vector<32x128xf32>
    %c1_i32 = arith.constant 1 : i32
    %4 = arith.muli %arg0, %c1_i32 : i32
    %5 = arith.addi %4, %arg1 : i32
    %c32_i32 = arith.constant 32 : i32
    %6 = arith.muli %5, %c32_i32 : i32
    %7 = tpu.assume_multiple %6, 32 : i32
    %8 = arith.index_cast %7 : i32 to index
    %c0_2 = arith.constant 0 : index
    %9 = vector.load %arg2[%8, %c0_2] : memref<64x1xi32, #tpu.memory_space<vmem>>, vector<32x1xi32>
    %10 = tpu.iota {dimensions = array<i32: 1>} : vector<32x128xi32>
    %11 = vector.broadcast %9 : vector<32x1xi32> to vector<32x128xi32>
    %12 = arith.cmpi eq, %10, %11 : vector<32x128xi32>
    %cst = arith.constant 0.899999976 : f32
    %cst_3 = arith.constant 7.93650805E-4 : f32
    %13 = vector.broadcast %cst : f32 to vector<32x128xf32>
    %14 = vector.broadcast %cst_3 : f32 to vector<32x128xf32>
    %15 = arith.select %12, %13, %14 : vector<32x128xi1>, vector<32x128xf32>
    %cst_4 = arith.constant -0.105360515 : f32
    %cst_5 = arith.constant -7.1388669 : f32
    %16 = vector.broadcast %cst_4 : f32 to vector<32x128xf32>
    %17 = vector.broadcast %cst_5 : f32 to vector<32x128xf32>
    %18 = arith.select %12, %16, %17 : vector<32x128xi1>, vector<32x128xf32>
    %c0_i32_6 = arith.constant 0 : i32
    %19 = vector.broadcast %c0_i32_6 : i32 to vector<32x128xi32>
    %20 = arith.cmpi eq, %10, %19 : vector<32x128xi32>
    %c0_i32_7 = arith.constant 0 : i32
    %21 = vector.broadcast %c0_i32_7 : i32 to vector<32x1xi32>
    %22 = arith.cmpi eq, %9, %21 : vector<32x1xi32>
    %23 = vector.broadcast %22 : vector<32x1xi1> to vector<32x128xi1>
    %24 = arith.ori %20, %23 : vector<32x128xi1>
    %25 = arith.subf %18, %3 : vector<32x128xf32>
    %26 = arith.mulf %15, %25 : vector<32x128xf32>
    %cst_8 = arith.constant 0.000000e+00 : f32
    %27 = vector.broadcast %cst_8 : f32 to vector<32x128xf32>
    %28 = arith.select %24, %27, %26 : vector<32x128xi1>, vector<32x128xf32>
    %c0_9 = arith.constant 0 : index
    %c0_10 = arith.constant 0 : index
    %29 = vector.load %arg4[%c0_9, %c0_10] : memref<8x128xf32, #tpu.memory_space<vmem>>, vector<8x128xf32>
    %30 = vector.shape_cast %28 : vector<32x128xf32> to vector<4x8x128xf32>
    %cst_11 = arith.constant dense<0.000000e+00> : vector<8x128xf32>
    %31 = vector.multi_reduction <add>, %30, %cst_11 [0] : vector<4x8x128xf32> to vector<8x128xf32>
    %32 = arith.addf %29, %31 : vector<8x128xf32>
    %c0_12 = arith.constant 0 : index
    %c0_13 = arith.constant 0 : index
    %33 = vector.load %arg4[%c0_12, %c0_13] : memref<8x128xf32, #tpu.memory_space<vmem>>, vector<8x128xf32>
    tpu.vector_store %arg4[%c0_12, %c0_13], %32 {strides = array<i32>} : memref<8x128xf32, #tpu.memory_space<vmem>>, vector<8x128xf32>,
    return
  }
  func.func @transform_0(%arg0: i32, %arg1: i32) -> (i32, i32) {
    %c0_i32 = arith.constant 0 : i32
    %c0_i32_0 = arith.constant 0 : i32
    %c0_i32_1 = arith.constant 0 : i32
    return %c0_i32, %c0_i32_0 : i32, i32
  }
  func.func @transform_1(%arg0: i32, %arg1: i32) -> (i32, i32) {
    %c1_i32 = arith.constant 1 : i32
    %0 = arith.muli %arg0, %c1_i32 : i32
    %1 = arith.addi %0, %arg1 : i32
    %c0_i32 = arith.constant 0 : i32
    %c0_i32_0 = arith.constant 0 : i32
    return %1, %c0_i32 : i32, i32
  }
  func.func @transform_2(%arg0: i32, %arg1: i32) -> (i32, i32) {
    %c0_i32 = arith.constant 0 : i32
    %c0_i32_0 = arith.constant 0 : i32
    return %arg0, %c0_i32 : i32, i32
  }
}

</mosaic_0001>

<llo_original>
// kernel: tpu_custom_call.1
$region0: #{tpu_custom_call.1}
  #allocation0 [shape = 'u32[]', space=smem, size = 0x4, offset = 0x4, fixed_abs, tag = 'smem constant byte address 0x4 - core index']
  #allocation1 [shape = 'u32[72,128]{1,0:T(1,128)}', space=vmem, size = 0x9000, scoped, tag = 'internal scratch']
  %s0 = inlined_call_operand.vmem [shape: s32[64,1], index: 0, kind: input, shape index: {}]
  %s1 = inlined_call_operand.vmem [shape: f32[64,128], index: 1, kind: input, shape index: {}]
  %s2 = inlined_call_operand.hbm [shape: f32[16,128], index: 2, kind: output, shape index: {}]
  %s3 = sld [smem:[#allocation0]]
  $region45: #{tpu_custom_call.1} parent=0
    _
  %s5 = ssub.s32 1, %s3
  %s6 = scalar_select 0, %s5, %s3
  $region1: #{tpu_custom_call.1} parent=0
    #allocation2 [shape = 'u8[8192]{0}', space=vmem, size = 0x2000, scoped, tag = 'output window, operand 0']
    #allocation3 [shape = 's32[2]{0}', space=sflag, size = 0x8, scoped, tag = 'scoped memory for tpu_custom_call.1']
    %7 = vsyncpa [#allocation3], 0
    %s8 = scalar_lea.sflag [#allocation3], 1
    %9 = vsyncpa %s8, 0
    loop: start=0, step=1, limit=4
    $region2: #{tpu_custom_call.1} parent=1 // loop_pre_header
      _
    $region3: #{tpu_custom_call.1} parent=1 // loop_header
      %s11 = sphi 0, %s15
      %p12 = scmp.ge.s32.totalorder %s11, 4
      %s18 = sphi 0, %s30
      %s19 = sphi 0, %s26
      %s20 = sphi 0, %s18
      %s21 = sphi 0, %s19
      %s22 = sphi 0, %s20
      %s23 = sphi 0, %s21
      %s31 = sphi 0, %s31
      %s33 = sphi 0, %s31
      %s34 = sphi 0, %s33
      %s48 = sphi 0, %s34
      %s56 = sphi 0, %s58
      %s59 = sphi 0, %s56
      %s60 = sphi 0, %s59
      %s76 = sphi 0, %s60
      %s82 = sphi 0, %s84
      %s85 = sphi 0, %s82
      %s86 = sphi 0, %s85
      %s102 = sphi 0, %s86
    $region4: #{tpu_custom_call.1} parent=1 // loop_header_branch
      %14 = sbr.rel (%p12) target = $region8
    $region5: #{tpu_custom_call.1} parent=1 // loop_body
      %s16 = ssub.s32 %s11, 1
      %s17 = ssub.s32 %s11, 2
      %s24 = sadd.s32 1, %s19
      %p25 = scmp.ge.s32.totalorder %s24, 1
      %s26 = scalar_select %p25, 0, %s24
      %s27 = sadd.s32 1, %s18
      %s28 = scalar_select %p25, %s27, %s18
      %p29 = scmp.ge.s32.totalorder %s28, 2
      %s30 = scalar_select %p29, 0, %s28
      %s32 = sadd.s32 %s31, 1
      %p35 = scmp.eq.s32.totalorder %s11, 1
      %p36 = scmp.ne.s32.totalorder %s31, %s33
      %p37 = scmp.eq.s32.totalorder %s11, 0
      %p38 = por %p36, %p37
      %p39 = scmp.ne.s32.totalorder %s31, %s33
      %p40 = scmp.eq.s32.totalorder %s16, 1
      %p41 = por %p39, %p40
      %p42 = scmp.ne.s32.totalorder %s33, %s34
      %p43 = scmp.eq.s32.totalorder %s16, 0
      %p44 = por %p42, %p43
      %p45 = scmp.ne.s32.totalorder %s33, %s34
      %p46 = scmp.eq.s32.totalorder %s17, 1
      %p47 = por %p45, %p46
      %p49 = scmp.ne.s32.totalorder %s34, %s48
      %p50 = scmp.eq.s32.totalorder %s17, 0
      %p51 = por %p49, %p50
      %s52 = sadd.s32 %s18, %s19
      %s53 = sadd.s32 %s30, %s26
      %s54 = ssub.s32 %s52, %s53
      %p55 = scmp.eq.s32.totalorder %s54, 0
      %s57 = sadd.s32 %s56, 1
      %s58 = scalar_select %p55, %s56, %s57
      %p61 = pneg %p55
      %p62 = scmp.eq.s32.totalorder %s11, 1
      %p63 = por %p61, %p62
      %p64 = scmp.ne.s32.totalorder %s56, %s59
      %p65 = scmp.eq.s32.totalorder %s11, 0
      %p66 = por %p64, %p65
      %p67 = scmp.ne.s32.totalorder %s56, %s59
      %p68 = scmp.eq.s32.totalorder %s16, 1
      %p69 = por %p67, %p68
      %p70 = scmp.ne.s32.totalorder %s59, %s60
      %p71 = scmp.eq.s32.totalorder %s16, 0
      %p72 = por %p70, %p71
      %p73 = scmp.ne.s32.totalorder %s59, %s60
      %p74 = scmp.eq.s32.totalorder %s17, 1
      %p75 = por %p73, %p74
      %p77 = scmp.ne.s32.totalorder %s60, %s76
      %p78 = scmp.eq.s32.totalorder %s17, 0
      %p79 = por %p77, %p78
      %s80 = ssub.s32 %s18, %s30
      %p81 = scmp.eq.s32.totalorder %s80, 0
      %s83 = sadd.s32 %s82, 1
      %s84 = scalar_select %p81, %s82, %s83
      %p87 = pneg %p81
      %p88 = scmp.eq.s32.totalorder %s11, 1
      %p89 = por %p87, %p88
      %p90 = scmp.ne.s32.totalorder %s82, %s85
      %p91 = scmp.eq.s32.totalorder %s11, 0
      %p92 = por %p90, %p91
      %p93 = scmp.ne.s32.totalorder %s82, %s85
      %p94 = scmp.eq.s32.totalorder %s16, 1
      %p95 = por %p93, %p94
      %p96 = scmp.ne.s32.totalorder %s85, %s86
      %p97 = scmp.eq.s32.totalorder %s16, 0
      %p98 = por %p96, %p97
      %p99 = scmp.ne.s32.totalorder %s85, %s86
      %p100 = scmp.eq.s32.totalorder %s17, 1
      %p101 = por %p99, %p100
      %p103 = scmp.ne.s32.totalorder %s86, %s102
      %p104 = scmp.eq.s32.totalorder %s17, 0
      %p105 = por %p103, %p104
      %p106 = scmp.le.s32.totalorder 1, %s11
      %p107 = scmp.lt.s32.totalorder %s11, 3
      %p108 = pnand %p106, %p107
      %p109 = pneg %p108
      // Predicated region
      $region9: #{tpu_custom_call.1} parent=5 // pred_check
        _
      $region10: #{tpu_custom_call.1} parent=5 // pred_check_branch
        %111 = sbr.rel (%p108) target = $region12
      $region11: #{tpu_custom_call.1} parent=5 // pred_region
        %s112 = ssub.s32 %s11, 1
        // Predicated region
        $region13: #{tpu_custom_call.1} parent=11 // pred_check
          %p113 = pneg %p44
        $region14: #{tpu_custom_call.1} parent=11 // pred_check_branch
          %115 = sbr.rel (%p113) target = $region16
        $region15: #{tpu_custom_call.1} parent=11 // pred_region
          _
        $region16: #{tpu_custom_call.1} parent=11 // pred_fallthru
          _
      $region12: #{tpu_custom_call.1} parent=5 // pred_fallthru
        _
      %p116 = scmp.lt.s32.totalorder %s11, 2
      // Predicated region
      $region17: #{tpu_custom_call.1} parent=5 // pred_check
        %p117 = pneg %p116
      $region18: #{tpu_custom_call.1} parent=5 // pred_check_branch
        %119 = sbr.rel (%p117) target = $region20
      $region19: #{tpu_custom_call.1} parent=5 // pred_region
        // Predicated region
        $region21: #{tpu_custom_call.1} parent=19 // pred_check
          %p120 = pneg %p66
        $region22: #{tpu_custom_call.1} parent=19 // pred_check_branch
          %122 = sbr.rel (%p120) target = $region24
        $region23: #{tpu_custom_call.1} parent=19 // pred_region
          %s123 = sadd.s32 %s18, %s19
          %s124 = smul.u32 4, %s123
          %p125 = scmp.lt.s32.totalorder %s124, 7
          %s126 = scalar_select %p125, %s124, 7
          %s127 = smul.addr %s126, 8
          %s128 = scalar_lea.vmem %s1, %s127
          %s129 = sadd.s32 %s18, %s19
          %s130 = smul.u32 4, %s129
        $region24: #{tpu_custom_call.1} parent=19 // pred_fallthru
          _
      $region20: #{tpu_custom_call.1} parent=5 // pred_fallthru
        _
      %p131 = scmp.le.s32.totalorder 1, %s11
      %p132 = scmp.lt.s32.totalorder %s11, 3
      %p133 = pnand %p131, %p132
      %p134 = pneg %p133
      // Predicated region
      $region25: #{tpu_custom_call.1} parent=5 // pred_check
        _
      $region26: #{tpu_custom_call.1} parent=5 // pred_check_branch
        %136 = sbr.rel (%p133) target = $region28
      $region27: #{tpu_custom_call.1} parent=5 // pred_region
        %s137 = ssub.s32 %s11, 1
        %p138 = pneg %p44
        %p139 = pneg %p41
        %s140 = sadd.s32 %s20, %s21
        %s141 = smul.u32 4, %s140
        %p142 = scmp.lt.s32.totalorder %s141, 7
        %s143 = scalar_select %p142, %s141, 7
        %s144 = smul.addr %s143, 8
        %s145 = scalar_lea.vmem %s1, %s144
        %p146 = pneg %p72
        %p147 = pneg %p69
        %p148 = pneg %p98
        %p149 = pneg %p95
        %s150 = sand.u32 %s85, 1
        %s151 = scalar_lea.sflag [#allocation3], %s150
        %s152 = sand.u32 %s85, 1
        %s153 = smul.addr %s152, 8
        %s154 = scalar_lea.vmem [#allocation2], %s153
        %s155 = sadd.s32 %s20, %s21
        %s156 = smul.u32 4, %s155
        %p157 = scmp.lt.s32.totalorder %s156, 7
        %s158 = scalar_select %p157, %s156, 7
        %s159 = smul.addr %s158, 8
        %s160 = scalar_lea.vmem %s1, %s159
        %s161 = sadd.s32 %s20, %s21
        %s162 = smul.u32 4, %s161
        %p163 = scmp.eq.s32.totalorder %s21, 0
        // Predicated region
        $region29: #{tpu_custom_call.1} parent=27 // pred_check
          %p164 = pneg %p163
        $region30: #{tpu_custom_call.1} parent=27 // pred_check_branch
          %166 = sbr.rel (%p164) target = $region32
        $region31: #{tpu_custom_call.1} parent=27 // pred_region
          %167 = vst [vmem:[%s154] sm:$0xff] 0.0
        $region32: #{tpu_custom_call.1} parent=27 // pred_fallthru
          _
        %v168 = vld [vmem:[%s160] sm:$0xff]
        %v169 = vld [vmem:[%s160 + $0x8] sm:$0xff]
        %v170 = vld [vmem:[%s160 + $0x10] sm:$0xff]
        %v171 = vld [vmem:[%s160 + $0x18] sm:$0xff]
        %s172 = sadd.s32 %s20, %s21
        %s173 = smul.u32 %s172, 32
        %s174 = scalar_lea.vmem %s0, %s173
        %v175 = vld [vmem:[%s174] sm:$0xff]
        %v176 = vld [vmem:[%s174 + $0x8] sm:$0xff]
        %v177 = vld [vmem:[%s174 + $0x10] sm:$0xff]
        %v178 = vld [vmem:[%s174 + $0x18] sm:$0xff]
        %v179 = vlaneseq
        %v180 = vand.u32 %v179, 127
        %181 = vset.pattern.permute.xlu0 0
        %182 = vperm.xlu0 %181, %v175
        %v183 = vpop.permute.xlu0 %182
        %184 = vset.pattern.permute.xlu0 0
        %185 = vperm.xlu0 %184, %v176
        %v186 = vpop.permute.xlu0 %185
        %187 = vset.pattern.permute.xlu0 0
        %188 = vperm.xlu0 %187, %v177
        %v189 = vpop.permute.xlu0 %188
        %190 = vset.pattern.permute.xlu0 0
        %191 = vperm.xlu0 %190, %v178
        %v192 = vpop.permute.xlu0 %191
        %vm193 = vcmp.eq.s32.totalorder %v180, %v183
        %vm194 = vcmp.eq.s32.totalorder %v180, %v186
        %vm195 = vcmp.eq.s32.totalorder %v180, %v189
        %vm196 = vcmp.eq.s32.totalorder %v180, %v192
        %v197 = vsel %vm193, 0.9, 0.0007936508
        %v198 = vsel %vm194, 0.9, 0.0007936508
        %v199 = vsel %vm195, 0.9, 0.0007936508
        %v200 = vsel %vm196, 0.9, 0.0007936508
        %v201 = vsel %vm193, -0.105360515, -7.138867
        %v202 = vsel %vm194, -0.105360515, -7.138867
        %v203 = vsel %vm195, -0.105360515, -7.138867
        %v204 = vsel %vm196, -0.105360515, -7.138867
        %vm205 = vcmp.eq.s32.totalorder %v180, 0
        %vm206 = vcmp.eq.s32.totalorder %v175, 0
        %vm207 = vcmp.eq.s32.totalorder %v176, 0
        %vm208 = vcmp.eq.s32.totalorder %v177, 0
        %vm209 = vcmp.eq.s32.totalorder %v178, 0
        %v210 = vsel %vm206, 1, 0
        %v211 = vsel %vm207, 1, 0
        %v212 = vsel %vm208, 1, 0
        %v213 = vsel %vm209, 1, 0
        %214 = vset.pattern.permute.xlu0 0
        %215 = vperm.xlu0 %214, %v210
        %v216 = vpop.permute.xlu0 %215
        %217 = vset.pattern.permute.xlu0 0
        %218 = vperm.xlu0 %217, %v211
        %v219 = vpop.permute.xlu0 %218
        %220 = vset.pattern.permute.xlu0 0
        %221 = vperm.xlu0 %220, %v212
        %v222 = vpop.permute.xlu0 %221
        %223 = vset.pattern.permute.xlu0 0
        %224 = vperm.xlu0 %223, %v213
        %v225 = vpop.permute.xlu0 %224
        %vm226 = vcmp.eq.s32.totalorder %v216, 1
        %vm227 = vcmp.eq.s32.totalorder %v219, 1
        %vm228 = vcmp.eq.s32.totalorder %v222, 1
        %vm229 = vcmp.eq.s32.totalorder %v225, 1
        %vm230 = vmor %vm205, %vm226
        %vm231 = vmor %vm205, %vm227
        %vm232 = vmor %vm205, %vm228
        %vm233 = vmor %vm205, %vm229
        %v234 = vsub.f32 %v201, %v168
        %v235 = vsub.f32 %v202, %v169
        %v236 = vsub.f32 %v203, %v170
        %v237 = vsub.f32 %v204, %v171
        %v238 = vmul.f32 %v197, %v234
        %v239 = vmul.f32 %v198, %v235
        %v240 = vmul.f32 %v199, %v236
        %v241 = vmul.f32 %v200, %v237
        %v242 = vsel %vm230, 0.0, %v238
        %v243 = vsel %vm231, 0.0, %v239
        %v244 = vsel %vm232, 0.0, %v240
        %v245 = vsel %vm233, 0.0, %v241
        %v246 = vld [vmem:[%s154] sm:$0xff]
        %v247 = vadd.f32 %v242, %v243
        %v248 = vadd.f32 %v247, %v244
        %v249 = vadd.f32 %v248, %v245
        %v250 = vadd.f32 %v246, %v249
        %251 = vst [vmem:[%s154] sm:$0xff] %v250
        %s252 = sand.u32 %s85, 1
        %s253 = scalar_lea.sflag [#allocation3], %s252
        %s254 = sand.u32 %s85, 1
        %s255 = smul.addr %s254, 8
        %s256 = scalar_lea.vmem [#allocation2], %s255
        // Predicated region
        $region33: #{tpu_custom_call.1} parent=27 // pred_check
          %p257 = pneg %p95
        $region34: #{tpu_custom_call.1} parent=27 // pred_check_branch
          %259 = sbr.rel (%p257) target = $region36
        $region35: #{tpu_custom_call.1} parent=27 // pred_region
          %261 = vsyncadd %s253, 0
          %s262 = smul.addr %s20, 8
          %s263 = scalar_lea.hbm %s2, %s262
          %s265 = sshll.u32 %s256, 4
          %s266 = int_to_ptr.vmem [resolvable:$true] %s265
          %s267 = sshll.u32 %s263, 4
          %s268 = int_to_ptr.hbm [resolvable:$true] %s267
          %270 = dma.vmem_to_hbm [thread:$0]  %s266, 128, %s268, %s253
        $region36: #{tpu_custom_call.1} parent=27 // pred_fallthru
          _
      $region28: #{tpu_custom_call.1} parent=5 // pred_fallthru
        _
      %p271 = scmp.le.s32.totalorder 2, %s11
      // Predicated region
      $region37: #{tpu_custom_call.1} parent=5 // pred_check
        %p272 = pneg %p271
      $region38: #{tpu_custom_call.1} parent=5 // pred_check_branch
        %274 = sbr.rel (%p272) target = $region40
      $region39: #{tpu_custom_call.1} parent=5 // pred_region
        %s275 = ssub.s32 %s11, 2
        // Predicated region
        $region41: #{tpu_custom_call.1} parent=39 // pred_check
          %p276 = pneg %p101
        $region42: #{tpu_custom_call.1} parent=39 // pred_check_branch
          %278 = sbr.rel (%p276) target = $region44
        $region43: #{tpu_custom_call.1} parent=39 // pred_region
          %s279 = sand.u32 %s86, 1
          %s280 = scalar_lea.sflag [#allocation3], %s279
          %s281 = sand.u32 %s86, 1
          %s282 = smul.addr %s281, 8
          %s283 = scalar_lea.vmem [#allocation2], %s282
          %285 = dma.done %s280, 128
        $region44: #{tpu_custom_call.1} parent=39 // pred_fallthru
          _
      $region40: #{tpu_custom_call.1} parent=5 // pred_fallthru
        _
    $region6: #{tpu_custom_call.1} parent=1 // loop_footer
      %s15 = sadd.s32 1, %s11
    $region7: #{tpu_custom_call.1} parent=1 // loop_footer_branch
      %10 = sbr.rel target = $region3
    $region8: #{tpu_custom_call.1} parent=1 // loop_exit
      _
    %286 = vsyncpa [#allocation3], 1
    %s287 = scalar_lea.sflag [#allocation3], 1
    %288 = vsyncpa %s287, 1

</llo_original>
